<compile_context>
chip_gen: v5e
topology: v5e:2x2
jax: 0.10.0
libtpu: 0.0.40
codegen_flags: <defaults>
</compile_context>

<pallas_src>
import jax
import jax.numpy as jnp
from jax.experimental import pallas as pl
from jax.experimental.pallas import tpu as pltpu


# ----------------------------------------------------------------------------
# Pallas kernel: 1x1 conv == channel-contraction matmul on a (C_in, T) slab.
# ----------------------------------------------------------------------------
def _outconv_kernel(x_ref, w_ref, o_ref):
    # x_ref : (NB, C_in, T)   spatial-on-lane input tile
    # w_ref : (C_out, C_in)   1x1 conv weights (OI)
    # o_ref : (NB, C_out, T)
    x = x_ref[...]
    nb = x.shape[0]
    w = jnp.broadcast_to(w_ref[...][None, :, :], (nb,) + w_ref.shape)
    y = jax.lax.dot_general(
        w, x,
        dimension_numbers=(((2,), (1,)), ((0,), (0,))),
        preferred_element_type=jnp.float32,
    )                                           # (NB, C_out, T)
    o_ref[...] = y.astype(o_ref.dtype)


# ----------------------------------------------------------------------------
# Tile selection: per-generation VMEM budget, lane-dense T, >= 4 grid steps.
# ----------------------------------------------------------------------------
def _vmem_capacity_bytes():
    try:
        cap = getattr(pltpu.get_tpu_info(), "vmem_capacity_bytes", None)
        if cap:
            return int(cap)
    except Exception:
        pass
    return 64 << 20                      # conservative fallback (v7x per-TC)


def _largest_divisor_leq(n, cap):
    for d in range(min(n, cap), 0, -1):
        if n % d == 0:
            return d
    return 1


def _select_tiles(N, C_in, C_out, HW, itemsize, vmem_cap):
    # Budget for the double-buffered (input + output) blocks: ~1/4 of VMEM.
    block_budget = max(vmem_cap // 4, 4 << 20)

    # Batch block: bigger on v5e/v6e (128 MiB VMEM) than v7x (64 MiB).
    nb_cap = 16 if vmem_cap >= (96 << 20) else 8
    NB = _largest_divisor_leq(N, nb_cap)

    # Make sure even a minimal 128-lane tile fits the budget.
    while NB > 1 and 2 * NB * (C_in + C_out) * 128 * itemsize > block_budget:
        nb = NB // 2
        while nb > 1 and N % nb:
            nb -= 1
        NB = max(nb, 1)

    if HW <= 128:
        T = HW                            # full-extent lane block (legal)
    else:
        per_lane = 2 * NB * (C_in + C_out) * itemsize    # dbl-buffered bytes/lane
        t_budget = max(128, (block_budget // per_lane) // 128 * 128)
        t_steps = max(128, ((pl.cdiv(HW, 4) + 127) // 128) * 128)  # aim >=4 HW steps
        T = min(t_budget, t_steps, 8192, max(128, (HW // 128) * 128))

    # Guarantee multiple grid steps (>= 2 for v7x megacore, ideally >= 4) so
    # the double-buffered pipeline actually overlaps prefetch/compute/writeback.
    def total_steps(nb, t):
        return (N // nb) * ((HW + t - 1) // t)

    while total_steps(NB, T) < 4:
        if T > 128:
            T = max(128, (T // 2) // 128 * 128)
        elif NB > 1:
            nb = NB // 2
            while nb > 1 and N % nb:
                nb -= 1
            NB = max(nb, 1)
        else:
            break
    return NB, T


# ----------------------------------------------------------------------------
# Wrapper
# ----------------------------------------------------------------------------
def outconv_pallas(x, w):
    """1x1 conv, no bias.  x: (N, C_in, H, W); w: (C_out, C_in, 1, 1) or (C_out, C_in)."""
    N, C_in, H, W = x.shape
    w2d = w.reshape(w.shape[0], -1) if w.ndim == 4 else w
    assert w2d.shape[1] == C_in
    C_out = w2d.shape[0]
    w2d = w2d.astype(x.dtype)
    HW = H * W
    itemsize = jnp.dtype(x.dtype).itemsize

    x_flat = x.reshape(N, C_in, HW)          # contiguous reshape: no data movement

    vmem_cap = _vmem_capacity_bytes()
    NB, T = _select_tiles(N, C_in, C_out, HW, itemsize, vmem_cap)
    grid = (N // NB, pl.cdiv(HW, T))

    # Scoped-VMEM limit sized from the actual (double-buffered) blocks.
    block_bytes = (NB * C_in * T + NB * C_out * T + C_out * C_in) * itemsize
    vmem_limit = 2 * block_bytes + (4 << 20)
    vmem_limit = min(max(vmem_limit, 32 << 20), int(vmem_cap * 0.9))

    cost = pl.CostEstimate(
        flops=2 * N * C_out * C_in * HW,
        transcendentals=0,
        bytes_accessed=(N * C_in * HW + N * C_out * HW + C_out * C_in) * itemsize,
    )

    y_flat = pl.pallas_call(
        _outconv_kernel,
        out_shape=jax.ShapeDtypeStruct((N, C_out, HW), x.dtype),
        grid_spec=pltpu.PrefetchScalarGridSpec(
            num_scalar_prefetch=0,
            grid=grid,
            in_specs=[
                pl.BlockSpec((NB, C_in, T), lambda n, t: (n, 0, t)),
                pl.BlockSpec((C_out, C_in), lambda n, t: (0, 0)),
            ],
            out_specs=pl.BlockSpec((NB, C_out, T), lambda n, t: (n, 0, t)),
        ),
        compiler_params=pltpu.CompilerParams(
            dimension_semantics=("parallel", "parallel"),
            vmem_limit_bytes=int(vmem_limit),
        ),
        cost_estimate=cost,
    )(x_flat, w2d)
    return y_flat.reshape(N, C_out, H, W)


# ----------------------------------------------------------------------------
# Pure-JAX reference (sanity check against the kernel).
# ----------------------------------------------------------------------------
def _ref_outconv(x, w4d):
    return jax.lax.conv_general_dilated(
        x, w4d, window_strides=(1, 1), padding="VALID",
        dimension_numbers=("NCHW", "OIHW", "NCHW"),
        precision=jax.lax.Precision.HIGHEST)


if __name__ == "__main__":
    key = jax.random.PRNGKey(0)
    kx, kw = jax.random.split(key)

    # outconv(in_ch=8, out_ch=4)
    in_ch, out_ch = 8, 4
    N, H, W = 2, 16, 16

    x = jax.random.normal(kx, (N, in_ch, H, W), jnp.float32)
    w = 0.1 * jax.random.normal(kw, (out_ch, in_ch, 1, 1), jnp.float32)

    out = outconv_pallas(x, w)
    out = jax.block_until_ready(out)
    assert out.shape == (N, out_ch, H, W), out.shape

    ref = _ref_outconv(x, w)
    if not jnp.allclose(out, ref, atol=1e-4, rtol=1e-4):
        raise AssertionError("Pallas outconv mismatch vs JAX reference")

    print("KERNEL_OK")
</pallas_src>

<mosaic_0001>
module attributes {stable_mosaic.version = 11 : i64} {
  func.func @_outconv_kernel(%arg0: i32, %arg1: i32, %arg2: memref<1x8x128xf32, #tpu.memory_space<vmem>>, %arg3: memref<4x8xf32, #tpu.memory_space<vmem>>, %arg4: memref<1x4x128xf32, #tpu.memory_space<vmem>>) attributes {dimension_semantics = [#tpu.dimension_semantics<parallel>, #tpu.dimension_semantics<parallel>], iteration_bounds = array<i64: 2, 2>, scalar_prefetch = 0 : i64, scratch_operands = 0 : i64, tpu.core_type = #tpu.core_type<tc>, window_params = [{transform_indices = @transform_0, window_bounds = array<i64: 1, 8, 128>}, {pipeline_mode = #tpu.pipeline_mode<synchronous>, transform_indices = @transform_1, window_bounds = array<i64: 4, 8>}, {transform_indices = @transform_2, window_bounds = array<i64: 1, 4, 128>}]} {
    %c0 = arith.constant 0 : index
    %c0_0 = arith.constant 0 : index
    %c0_1 = arith.constant 0 : index
    %0 = vector.load %arg2[%c0, %c0_0, %c0_1] : memref<1x8x128xf32, #tpu.memory_space<vmem>>, vector<1x8x128xf32>
    %c0_2 = arith.constant 0 : index
    %c0_3 = arith.constant 0 : index
    %1 = vector.load %arg3[%c0_2, %c0_3] : memref<4x8xf32, #tpu.memory_space<vmem>>, vector<4x8xf32>
    %2 = vector.shape_cast %1 : vector<4x8xf32> to vector<1x4x8xf32>
    %cst = arith.constant dense<0.000000e+00> : vector<1x4x128xf32>
    %3 = tpu.matmul %2, %0, %cst {dimension_numbers = #tpu.dot_dimension_numbers<[2], [1], [1], [2], [0, 0, 0, 1, 1, 2], [0], [0]>} : vector<1x4x8xf32>, vector<1x8x128xf32>, vector<1x4x128xf32> -> vector<1x4x128xf32>
    %c0_4 = arith.constant 0 : index
    %c0_5 = arith.constant 0 : index
    %c0_6 = arith.constant 0 : index
    %4 = vector.load %arg4[%c0_4, %c0_5, %c0_6] : memref<1x4x128xf32, #tpu.memory_space<vmem>>, vector<1x4x128xf32>
    tpu.vector_store %arg4[%c0_4, %c0_5, %c0_6], %3 {strides = array<i32>} : memref<1x4x128xf32, #tpu.memory_space<vmem>>, vector<1x4x128xf32>,
    return
  }
  func.func @transform_0(%arg0: i32, %arg1: i32) -> (i32, i32, i32) {
    %c0_i32 = arith.constant 0 : i32
    %c0_i32_0 = arith.constant 0 : i32
    return %arg0, %c0_i32, %arg1 : i32, i32, i32
  }
  func.func @transform_1(%arg0: i32, %arg1: i32) -> (i32, i32) {
    %c0_i32 = arith.constant 0 : i32
    %c0_i32_0 = arith.constant 0 : i32
    %c0_i32_1 = arith.constant 0 : i32
    return %c0_i32, %c0_i32_0 : i32, i32
  }
  func.func @transform_2(%arg0: i32, %arg1: i32) -> (i32, i32, i32) {
    %c0_i32 = arith.constant 0 : i32
    %c0_i32_0 = arith.constant 0 : i32
    return %arg0, %c0_i32, %arg1 : i32, i32, i32
  }
}

</mosaic_0001>

<llo_original>
// kernel: tpu_custom_call.1
$region0: #{tpu_custom_call.1}
  #allocation0 [shape = 'u32[]', space=smem, size = 0x4, offset = 0x4, fixed_abs, tag = 'smem constant byte address 0x4 - core index']
  #allocation1 [shape = 'u32[72,128]{1,0:T(1,128)}', space=vmem, size = 0x9000, scoped, tag = 'internal scratch']
  %s0 = inlined_call_operand.hbm [shape: f32[2,8,256], index: 0, kind: input, shape index: {}]
  %s1 = inlined_call_operand.hbm [shape: f32[4,8], index: 1, kind: input, shape index: {}]
  %s2 = inlined_call_operand.hbm [shape: f32[2,4,256], index: 2, kind: output, shape index: {}]
  %s3 = sld [smem:[#allocation0]]
  $region49: #{tpu_custom_call.1} parent=0
    _
  %s5 = ssub.s32 1, %s3
  %s6 = scalar_select 0, %s5, %s3
  $region1: #{tpu_custom_call.1} parent=0
    #allocation2 [shape = 'u8[8192]{0}', space=vmem, size = 0x2000, scoped, tag = 'input window, operand 0']
    #allocation3 [shape = 's32[2]{0}', space=sflag, size = 0x8, scoped, tag = 'scoped memory for tpu_custom_call.1']
    #allocation4 [shape = 's32[2]{0}', space=sflag, size = 0x8, scoped, tag = 'scoped memory for tpu_custom_call.1']
    #allocation5 [shape = 'u8[2048]{0}', space=vmem, size = 0x800, scoped, tag = 'input window, operand 1, single buffered']
    #allocation6 [shape = 's32[1]{0}', space=sflag, size = 0x4, scoped, tag = 'scoped memory for tpu_custom_call.1']
    #allocation7 [shape = 'u8[4096]{0}', space=vmem, size = 0x1000, scoped, tag = 'output window, operand 0']
    %7 = vsyncpa [#allocation3], 0
    %s8 = scalar_lea.sflag [#allocation3], 1
    %9 = vsyncpa %s8, 0
    %10 = vsyncpa [#allocation6], 0
    %11 = vsyncpa [#allocation4], 0
    %s12 = scalar_lea.sflag [#allocation4], 1
    %13 = vsyncpa %s12, 0
    loop: start=0, step=1, limit=6
    $region2: #{tpu_custom_call.1} parent=1 // loop_pre_header
      _
    $region3: #{tpu_custom_call.1} parent=1 // loop_header
      %s15 = sphi 0, %s19
      %p16 = scmp.ge.s32.totalorder %s15, 6
      %s22 = sphi 0, %s34
      %s23 = sphi 0, %s30
      %s24 = sphi 0, %s22
      %s25 = sphi 0, %s23
      %s26 = sphi 0, %s24
      %s27 = sphi 0, %s25
      %s39 = sphi 0, %s41
      %s42 = sphi 0, %s39
      %s43 = sphi 0, %s42
      %s59 = sphi 0, %s43
      %s63 = sphi 0, %s63
      %s65 = sphi 0, %s63
      %s66 = sphi 0, %s65
      %s80 = sphi 0, %s66
      %s88 = sphi 0, %s90
      %s91 = sphi 0, %s88
      %s92 = sphi 0, %s91
      %s108 = sphi 0, %s92
    $region4: #{tpu_custom_call.1} parent=1 // loop_header_branch
      %18 = sbr.rel (%p16) target = $region8
    $region5: #{tpu_custom_call.1} parent=1 // loop_body
      %s20 = ssub.s32 %s15, 1
      %s21 = ssub.s32 %s15, 2
      %s28 = sadd.s32 1, %s23
      %p29 = scmp.ge.s32.totalorder %s28, 2
      %s30 = scalar_select %p29, 0, %s28
      %s31 = sadd.s32 1, %s22
      %s32 = scalar_select %p29, %s31, %s22
      %p33 = scmp.ge.s32.totalorder %s32, 2
      %s34 = scalar_select %p33, 0, %s32
      %s35 = ssub.s32 %s22, %s34
      %s36 = ssub.s32 %s23, %s30
      %s37 = sor.u32 %s35, %s36
      %p38 = scmp.eq.s32.totalorder %s37, 0
      %s40 = sadd.s32 %s39, 1
      %s41 = scalar_select %p38, %s39, %s40
      %p44 = pneg %p38
      %p45 = scmp.eq.s32.totalorder %s15, 3
      %p46 = por %p44, %p45
      %p47 = scmp.ne.s32.totalorder %s39, %s42
      %p48 = scmp.eq.s32.totalorder %s15, 0
      %p49 = por %p47, %p48
      %p50 = scmp.ne.s32.totalorder %s39, %s42
      %p51 = scmp.eq.s32.totalorder %s20, 3
      %p52 = por %p50, %p51
      %p53 = scmp.ne.s32.totalorder %s42, %s43
      %p54 = scmp.eq.s32.totalorder %s20, 0
      %p55 = por %p53, %p54
      %p56 = scmp.ne.s32.totalorder %s42, %s43
      %p57 = scmp.eq.s32.totalorder %s21, 3
      %p58 = por %p56, %p57
      %p60 = scmp.ne.s32.totalorder %s43, %s59
      %p61 = scmp.eq.s32.totalorder %s21, 0
      %p62 = por %p60, %p61
      %s64 = sadd.s32 %s63, 1
      %p67 = scmp.eq.s32.totalorder %s15, 3
      %p68 = scmp.ne.s32.totalorder %s63, %s65
      %p69 = scmp.eq.s32.totalorder %s15, 0
      %p70 = por %p68, %p69
      %p71 = scmp.ne.s32.totalorder %s63, %s65
      %p72 = scmp.eq.s32.totalorder %s20, 3
      %p73 = por %p71, %p72
      %p74 = scmp.ne.s32.totalorder %s65, %s66
      %p75 = scmp.eq.s32.totalorder %s20, 0
      %p76 = por %p74, %p75
      %p77 = scmp.ne.s32.totalorder %s65, %s66
      %p78 = scmp.eq.s32.totalorder %s21, 3
      %p79 = por %p77, %p78
      %p81 = scmp.ne.s32.totalorder %s66, %s80
      %p82 = scmp.eq.s32.totalorder %s21, 0
      %p83 = por %p81, %p82
      %s84 = ssub.s32 %s22, %s34
      %s85 = ssub.s32 %s23, %s30
      %s86 = sor.u32 %s84, %s85
      %p87 = scmp.eq.s32.totalorder %s86, 0
      %s89 = sadd.s32 %s88, 1
      %s90 = scalar_select %p87, %s88, %s89
      %p93 = pneg %p87
      %p94 = scmp.eq.s32.totalorder %s15, 3
      %p95 = por %p93, %p94
      %p96 = scmp.ne.s32.totalorder %s88, %s91
      %p97 = scmp.eq.s32.totalorder %s15, 0
      %p98 = por %p96, %p97
      %p99 = scmp.ne.s32.totalorder %s88, %s91
      %p100 = scmp.eq.s32.totalorder %s20, 3
      %p101 = por %p99, %p100
      %p102 = scmp.ne.s32.totalorder %s91, %s92
      %p103 = scmp.eq.s32.totalorder %s20, 0
      %p104 = por %p102, %p103
      %p105 = scmp.ne.s32.totalorder %s91, %s92
      %p106 = scmp.eq.s32.totalorder %s21, 3
      %p107 = por %p105, %p106
      %p109 = scmp.ne.s32.totalorder %s92, %s108
      %p110 = scmp.eq.s32.totalorder %s21, 0
      %p111 = por %p109, %p110
      %p112 = scmp.le.s32.totalorder 1, %s15
      %p113 = scmp.lt.s32.totalorder %s15, 5
      %p114 = pnand %p112, %p113
      %p115 = pneg %p114
      // Predicated region
      $region9: #{tpu_custom_call.1} parent=5 // pred_check
        _
      $region10: #{tpu_custom_call.1} parent=5 // pred_check_branch
        %117 = sbr.rel (%p114) target = $region12
      $region11: #{tpu_custom_call.1} parent=5 // pred_region
        %s118 = ssub.s32 %s15, 1
        // Predicated region
        $region13: #{tpu_custom_call.1} parent=11 // pred_check
          %p119 = pneg %p76
        $region14: #{tpu_custom_call.1} parent=11 // pred_check_branch
          %121 = sbr.rel (%p119) target = $region16
        $region15: #{tpu_custom_call.1} parent=11 // pred_region
          %123 = vsyncadd [#allocation6], 0
          %s125 = sshll.u32 %s1, 4
          %s126 = int_to_ptr.hbm [resolvable:$true] %s125
          %s127 = sshll.u32 [#allocation5], 4
          %s128 = int_to_ptr.vmem [resolvable:$true] %s127
          %130 = dma.hbm_to_vmem [thread:$0]  %s126, 64, %s128, [#allocation6]
        $region16: #{tpu_custom_call.1} parent=11 // pred_fallthru
          _
      $region12: #{tpu_custom_call.1} parent=5 // pred_fallthru
        _
      %p131 = scmp.lt.s32.totalorder %s15, 4
      // Predicated region
      $region17: #{tpu_custom_call.1} parent=5 // pred_check
        %p132 = pneg %p131
      $region18: #{tpu_custom_call.1} parent=5 // pred_check_branch
        %134 = sbr.rel (%p132) target = $region20
      $region19: #{tpu_custom_call.1} parent=5 // pred_region
        // Predicated region
        $region21: #{tpu_custom_call.1} parent=19 // pred_check
          %p135 = pneg %p49
        $region22: #{tpu_custom_call.1} parent=19 // pred_check_branch
          %137 = sbr.rel (%p135) target = $region24
        $region23: #{tpu_custom_call.1} parent=19 // pred_region
          %s138 = sand.u32 %s39, 1
          %s139 = scalar_lea.sflag [#allocation3], %s138
          %s140 = sand.u32 %s39, 1
          %s141 = smul.addr %s140, 8
          %s142 = scalar_lea.vmem [#allocation2], %s141
          %144 = vsyncadd %s139, 0
          %s145 = smul.addr %s22, 2
          %s146 = sadd.s32 %s23, %s145
          %s147 = smul.addr %s146, 8
          %s148 = scalar_lea.hbm %s0, %s147
          %s150 = sshll.u32 %s148, 4
          %s151 = int_to_ptr.hbm [resolvable:$true] %s150
          %s152 = sshll.u32 %s142, 4
          %s153 = int_to_ptr.vmem [resolvable:$true] %s152
          %155 = dma.hbm_to_vmem [thread:$0]  %s151, 128, %s153, %s139
        $region24: #{tpu_custom_call.1} parent=19 // pred_fallthru
          _
      $region20: #{tpu_custom_call.1} parent=5 // pred_fallthru
        _
      %p156 = scmp.le.s32.totalorder 1, %s15
      %p157 = scmp.lt.s32.totalorder %s15, 5
      %p158 = pnand %p156, %p157
      %p159 = pneg %p158
      // Predicated region
      $region25: #{tpu_custom_call.1} parent=5 // pred_check
        _
      $region26: #{tpu_custom_call.1} parent=5 // pred_check_branch
        %161 = sbr.rel (%p158) target = $region28
      $region27: #{tpu_custom_call.1} parent=5 // pred_region
        %s162 = ssub.s32 %s15, 1
        %s163 = sand.u32 %s42, 1
        %s164 = scalar_lea.sflag [#allocation3], %s163
        %s165 = sand.u32 %s42, 1
        %s166 = smul.addr %s165, 8
        %s167 = scalar_lea.vmem [#allocation2], %s166
        // Predicated region
        $region29: #{tpu_custom_call.1} parent=27 // pred_check
          %p168 = pneg %p55
        $region30: #{tpu_custom_call.1} parent=27 // pred_check_branch
          %170 = sbr.rel (%p168) target = $region32
        $region31: #{tpu_custom_call.1} parent=27 // pred_region
          %172 = dma.done %s164, 128
        $region32: #{tpu_custom_call.1} parent=27 // pred_fallthru
          _
        // Predicated region
        $region33: #{tpu_custom_call.1} parent=27 // pred_check
          %p173 = pneg %p76
        $region34: #{tpu_custom_call.1} parent=27 // pred_check_branch
          %175 = sbr.rel (%p173) target = $region36
        $region35: #{tpu_custom_call.1} parent=27 // pred_region
          %177 = dma.done [#allocation6], 64
        $region36: #{tpu_custom_call.1} parent=27 // pred_fallthru
          _
        %s178 = sand.u32 %s42, 1
        %s179 = scalar_lea.sflag [#allocation3], %s178
        %s180 = sand.u32 %s42, 1
        %s181 = smul.addr %s180, 8
        %s182 = scalar_lea.vmem [#allocation2], %s181
        %p183 = pneg %p55
        %p184 = pneg %p52
        %p185 = pneg %p76
        %p186 = pneg %p73
        %p187 = pneg %p104
        %p188 = pneg %p101
        %s189 = sand.u32 %s91, 1
        %s190 = scalar_lea.sflag [#allocation4], %s189
        %s191 = sand.u32 %s91, 1
        %s192 = smul.addr %s191, 4
        %s193 = scalar_lea.vmem [#allocation7], %s192
        %v194 = vld [vmem:[%s167] sm:$0xff]
        %v195 = vld [vmem:[#allocation5] sm:$0xf]
        %vm196 = vcmask 64512
        %v198 = vsel %vm196, %v195, 0
        %200 = vmatpush.msra.mxu0 0.0
        %201 = vmatpush.msra.mxu0 0.0
        %202 = vmatpush.msra.mxu0 0.0
        %203 = vmatpush.msra.mxu0 0.0
        %204 = vmatpush.msra.mxu0 0.0
        %205 = vmatpush.msra.mxu0 0.0
        %206 = vmatpush.msra.mxu0 0.0
        %207 = vmatpush.msra.mxu0 0.0
        %208 = vmatpush.msra.mxu0 0.0
        %209 = vmatpush.msra.mxu0 0.0
        %210 = vmatpush.msra.mxu0 0.0
        %211 = vmatpush.msra.mxu0 0.0
        %212 = vmatpush.msra.mxu0 0.0
        %213 = vmatpush.msra.mxu0 0.0
        %214 = vmatpush.msra.mxu0 0.0
        %215 = vmatpush.msra.mxu0 %v194
        %216 = vmatmul.f32.gmra.mxu0 %v198
        %v217 = vpop.f32.mrf.mxu0
        %v218 = vadd.f32 0.0, %v217
        %219 = vdwg.mxu0
        %220 = vst [vmem:[%s193] sm:$0xf] %v218
        %s221 = sand.u32 %s91, 1
        %s222 = scalar_lea.sflag [#allocation4], %s221
        %s223 = sand.u32 %s91, 1
        %s224 = smul.addr %s223, 4
        %s225 = scalar_lea.vmem [#allocation7], %s224
        // Predicated region
        $region37: #{tpu_custom_call.1} parent=27 // pred_check
          %p226 = pneg %p101
        $region38: #{tpu_custom_call.1} parent=27 // pred_check_branch
          %228 = sbr.rel (%p226) target = $region40
        $region39: #{tpu_custom_call.1} parent=27 // pred_region
          %230 = vsyncadd %s222, 0
          %s231 = smul.addr %s24, 2
          %s232 = sadd.s32 %s25, %s231
          %s233 = smul.addr %s232, 4
          %s234 = scalar_lea.hbm %s2, %s233
          %s236 = sshll.u32 %s225, 4
          %s237 = int_to_ptr.vmem [resolvable:$true] %s236
          %s238 = sshll.u32 %s234, 4
          %s239 = int_to_ptr.hbm [resolvable:$true] %s238
          %241 = dma.vmem_to_hbm [thread:$0]  %s237, 64, %s239, %s222
        $region40: #{tpu_custom_call.1} parent=27 // pred_fallthru
          _
      $region28: #{tpu_custom_call.1} parent=5 // pred_fallthru
        _
      %p242 = scmp.le.s32.totalorder 2, %s15
      // Predicated region
      $region41: #{tpu_custom_call.1} parent=5 // pred_check
        %p243 = pneg %p242
      $region42: #{tpu_custom_call.1} parent=5 // pred_check_branch
        %245 = sbr.rel (%p243) target = $region44
      $region43: #{tpu_custom_call.1} parent=5 // pred_region
        %s246 = ssub.s32 %s15, 2
        // Predicated region
        $region45: #{tpu_custom_call.1} parent=43 // pred_check
          %p247 = pneg %p107
        $region46: #{tpu_custom_call.1} parent=43 // pred_check_branch
          %249 = sbr.rel (%p247) target = $region48
        $region47: #{tpu_custom_call.1} parent=43 // pred_region
          %s250 = sand.u32 %s92, 1
          %s251 = scalar_lea.sflag [#allocation4], %s250
          %s252 = sand.u32 %s92, 1
          %s253 = smul.addr %s252, 4
          %s254 = scalar_lea.vmem [#allocation7], %s253
          %256 = dma.done %s251, 64
        $region48: #{tpu_custom_call.1} parent=43 // pred_fallthru
          _
      $region44: #{tpu_custom_call.1} parent=5 // pred_fallthru
        _
    $region6: #{tpu_custom_call.1} parent=1 // loop_footer
      %s19 = sadd.s32 1, %s15
    $region7: #{tpu_custom_call.1} parent=1 // loop_footer_branch
      %14 = sbr.rel target = $region3
    $region8: #{tpu_custom_call.1} parent=1 // loop_exit
      _
    %257 = vsyncpa [#allocation3], 1
    %s258 = scalar_lea.sflag [#allocation3], 1
    %259 = vsyncpa %s258, 1
    %260 = vsyncpa [#allocation6], 1
    %261 = vsyncpa [#allocation4], 1
    %s262 = scalar_lea.sflag [#allocation4], 1
    %263 = vsyncpa %s262, 1

</llo_original>
